<compile_context>
chip_gen: v7x
topology: tpu7x:2x2x1
jax: 0.10.0
libtpu: 0.0.40
codegen_flags: <defaults>
</compile_context>

<pallas_src>
import functools

import jax
import jax.numpy as jnp
from jax import lax
from jax.experimental import pallas as pl
from jax.experimental.pallas import tpu as pltpu


def _vmem_capacity_bytes():
    """Per-core VMEM capacity, queried at trace time (v5e/v6e 128MiB, v7x 64MiB)."""
    try:
        return int(pltpu.get_tpu_info().vmem_capacity_bytes)
    except Exception:
        return 64 * 1024 * 1024  # smallest (v7x) capacity as a safe fallback


def _vq_kernel(x_ref, e_ref, et_ref, e2_ref, quant_ref, idx_ref, sse_ref,
               *, hw_valid, use_vpu_dist):
    """One grid step quantizes a tile of T spatial positions of one batch item.

    Layout is channel-major inside the kernel so the spatial axis stays on the
    128-lane axis throughout (lane-dense loads and stores, no transposes):

    x_ref:     (1, C, T)  NCHW input tile (native dtype; upcast here)
    e_ref:     (K, D)     codebook (resident, f32)
    et_ref:    (D, K)     pre-transposed codebook (resident, f32)
    e2_ref:    (K, 1)     precomputed ||e_k||^2 (resident, f32)
    quant_ref: (1, C, T)  nearest-codeword reconstruction, NCHW layout, f32
    idx_ref:   (1, 1, T)  int32 code index per spatial position
    sse_ref:   (1, 1, 1)  this block's sum of squared error (quant - x)^2
    """
    x_ct = x_ref[0].astype(jnp.float32)          # (C, T)
    e = e_ref[...]                               # (K, D)
    e_t = et_ref[...]                            # (D, K)
    e2 = e2_ref[...]                             # (K, 1)
    k, d = e.shape
    t = x_ct.shape[1]

    # Distances up to the per-column constant ||x_t||^2 (cannot change argmin):
    #   dist[k, t] = ||e_k||^2 - 2 <e_k, x_t>
    if use_vpu_dist:
        # Tiny C / K: the MXU would be nearly empty; unrolled VPU outer products.
        xe = e[:, 0:1] * x_ct[0:1, :]                              # (K, T)
        for c in range(1, d):
            xe = xe + e[:, c:c + 1] * x_ct[c:c + 1, :]
    else:
        xe = jnp.dot(e, x_ct, preferred_element_type=jnp.float32)  # (K, T) MXU
    dist = e2 - 2.0 * xe                                           # (K, T)

    # First-occurrence argmin over the codebook (sublane) axis.
    dmin = jnp.min(dist, axis=0, keepdims=True)                    # (1, T)
    iota_k = lax.broadcasted_iota(jnp.int32, dist.shape, 0).astype(jnp.float32)
    cand = jnp.where(dist == dmin, iota_k, jnp.float32(k))         # (K, T)
    first = jnp.min(cand, axis=0, keepdims=True)                   # (1, T)
    onehot_kt = (iota_k == first).astype(jnp.float32)              # (K, T)

    # Exact f32 gather of codebook rows: (D, K) @ (K, T) -> (C, T) on the MXU.
    quant_ct = jnp.dot(e_t, onehot_kt, preferred_element_type=jnp.float32)

    quant_ref[...] = quant_ct[None].astype(quant_ref.dtype)        # (1, C, T)
    idx_ref[...] = first.astype(jnp.int32)[None]                   # (1, 1, T)

    diff = quant_ct - x_ct
    if hw_valid is not None:
        # Spatial extent was padded up to a lane-dense multiple; mask the tail
        # columns out of the SSE (they are sliced off of quant/idx outside).
        col = lax.broadcasted_iota(jnp.int32, (1, t), 1) + pl.program_id(1) * t
        diff = jnp.where(col < hw_valid, diff, 0.0)
    sse_ref[...] = jnp.sum(diff * diff).reshape(1, 1, 1)


def _choose_tile_hw(hw, batch, c, k, vmem_capacity_bytes):
    """Pick (tile_hw, padded_hw): lane-dense tile (multiple of 128) fitting VMEM."""
    # Resident codebook (e, e_t, e2), conservatively doubled for pipeline buffers.
    resident = 2 * (2 * k * c + k) * 4
    # f32 bytes live per spatial element per step: double-buffered x / quant /
    # idx blocks plus the (K,T)- and (C,T)-shaped in-kernel temporaries.
    bytes_per_elem = 4 * (7 * c + 5 * k + 4)
    budget = int(vmem_capacity_bytes * 0.4) - resident
    cap = (max(budget, 0) // bytes_per_elem) // 128 * 128
    cap = max(128, min(cap, 8192))

    hw_pad = pl.cdiv(hw, 128) * 128
    if batch > 1:
        limit = cap
    else:
        # Keep >= 2 grid blocks so both v7x TensorCores get work.
        limit = max(128, min(cap, (hw_pad // 2) // 128 * 128))

    tile = max(128, (min(limit, hw_pad) // 128) * 128)
    while tile > 128 and hw_pad % tile != 0:
        tile -= 128
    return tile, hw_pad


def _vq_pallas(x, e, e_t, e2, *, tile_hw, n_j, hw_valid, vmem_limit_bytes):
    """Run the VQ kernel over the (B, C, HW_pad) NCHW input."""
    B, C, HWp = x.shape
    K, D = e.shape
    n_blocks = B * n_j
    use_vpu_dist = (D <= 8 and K <= 128)

    kernel = functools.partial(
        _vq_kernel, hw_valid=hw_valid, use_vpu_dist=use_vpu_dist)

    out_shape = (
        jax.ShapeDtypeStruct((B, C, HWp), jnp.float32),       # quantized (NCHW)
        jax.ShapeDtypeStruct((B, 1, HWp), jnp.int32),          # code indices
        jax.ShapeDtypeStruct((n_blocks, 1, 1), jnp.float32),   # per-block SSE
    )

    grid_spec = pltpu.PrefetchScalarGridSpec(
        num_scalar_prefetch=0,
        grid=(B, n_j),
        in_specs=[
            pl.BlockSpec((1, C, tile_hw), lambda b, j: (b, 0, j)),   # input tile
            pl.BlockSpec((K, D), lambda b, j: (0, 0)),               # codebook
            pl.BlockSpec((D, K), lambda b, j: (0, 0)),               # codebook^T
            pl.BlockSpec((K, 1), lambda b, j: (0, 0)),               # ||e||^2
        ],
        out_specs=[
            pl.BlockSpec((1, C, tile_hw), lambda b, j: (b, 0, j)),
            pl.BlockSpec((1, 1, tile_hw), lambda b, j: (b, 0, j)),
            pl.BlockSpec((1, 1, 1), lambda b, j: (b * n_j + j, 0, 0)),
        ],
    )

    return pl.pallas_call(
        kernel,
        grid_spec=grid_spec,
        out_shape=out_shape,
        compiler_params=pltpu.CompilerParams(
            # Every output block is written exactly once -> both axes parallel
            # (lets v7x shard the grid across its two TensorCores).
            dimension_semantics=("parallel", "parallel"),
            vmem_limit_bytes=vmem_limit_bytes,
        ),
    )(x, e, e_t, e2)


@functools.partial(jax.jit, static_argnames=("beta",))
def vector_quantizer_forward(inputs_nchw, embedding, beta):
    """Forward pass matching VectorQuantizer.forward.

    inputs_nchw: (B, C, H, W) with C == embed_dim
    embedding:   (num_embed, embed_dim)
    Returns (loss, quantized_nchw, perplexity, encodings).
    """
    B, C, H, W = inputs_nchw.shape
    K, D = embedding.shape
    assert C == D, "channel dim must equal the embedding dim"
    HW = H * W

    # No NCHW->NHWC permute and no forced f32 copy: the kernel reads NCHW
    # blocks in the input's native dtype and upcasts on the fly.
    x = inputs_nchw.reshape(B, C, HW)
    e = embedding.astype(jnp.float32)
    e_t = jnp.transpose(e)                                   # (D, K), tiny
    e2 = jnp.sum(e * e, axis=1, keepdims=True)               # (K, 1), hoisted

    vmem_cap = _vmem_capacity_bytes()
    tile_hw, hw_pad = _choose_tile_hw(HW, B, C, K, vmem_cap)
    if hw_pad != HW:
        x = jnp.pad(x, ((0, 0), (0, 0), (0, hw_pad - HW)))
    n_j = hw_pad // tile_hw
    vmem_limit = min(int(vmem_cap * 0.75), 128 * 1024 * 1024)

    quant, idx, sse_parts = _vq_pallas(
        x, e, e_t, e2, tile_hw=tile_hw, n_j=n_j,
        hw_valid=(HW if hw_pad != HW else None),
        vmem_limit_bytes=vmem_limit)

    N = B * HW
    sse = jnp.sum(sse_parts)                                 # tree reduce
    # Forward values: q_latent_loss == e_latent_loss == MSE(quantized, inputs)
    # (.detach() only affects gradients), so loss = (1 + beta) * MSE.
    mse = sse / jnp.float32(N * D)
    loss = (1.0 + beta) * mse

    # Straight-through estimator: forward value is just `quantized` (already
    # produced in NCHW layout by the kernel).
    quantized_nchw = quant[:, :, :HW].reshape(B, C, H, W)

    # One-hot encodings / perplexity built from the int32 indices outside the
    # kernel (module API requires the dense (N, K) encodings as an output).
    flat_idx = idx[:, 0, :HW].reshape(-1)                    # (N,)
    encodings = jax.nn.one_hot(flat_idx, K, dtype=jnp.float32)
    avg_probs = jnp.mean(encodings, axis=0)
    perplexity = jnp.exp(-jnp.sum(avg_probs * jnp.log(avg_probs + 1e-10)))

    return loss, quantized_nchw, perplexity, encodings


if __name__ == "__main__":
    # Small shapes consistent with the module: embed_dim == channels.
    B, C, H, W = 2, 4, 16, 16
    num_embed, embed_dim, beta = 8, C, 0.25

    key = jax.random.PRNGKey(0)
    kx, ke = jax.random.split(key)
    x = jax.random.normal(kx, (B, C, H, W), dtype=jnp.float32)
    # nn.Embedding weight init: uniform(-1/num_embed, 1/num_embed)
    embedding = jax.random.uniform(
        ke, (num_embed, embed_dim), dtype=jnp.float32,
        minval=-1.0 / num_embed, maxval=1.0 / num_embed)

    loss, quantized, perplexity, encodings = vector_quantizer_forward(
        x, embedding, beta)
    jax.block_until_ready((loss, quantized, perplexity, encodings))

    # Quiet sanity check against a pure-JAX reference of the same math.
    flat = jnp.transpose(x, (0, 2, 3, 1)).reshape(-1, embed_dim)
    dist = (jnp.sum(flat**2, 1, keepdims=True) + jnp.sum(embedding**2, 1)
            - 2.0 * flat @ embedding.T)
    ref_idx = jnp.argmin(dist, axis=1)
    enc_ref = jax.nn.one_hot(ref_idx, num_embed, dtype=jnp.float32)
    q_ref = enc_ref @ embedding
    mse_ref = jnp.mean((q_ref - flat) ** 2)
    assert jnp.allclose(encodings, enc_ref)
    assert jnp.allclose(quantized,
                        jnp.transpose(q_ref.reshape(B, H, W, C), (0, 3, 1, 2)),
                        atol=1e-6)
    assert jnp.allclose(loss, (1.0 + beta) * mse_ref, rtol=1e-5)

    print("KERNEL_OK")
</pallas_src>

<mosaic_0001>
module attributes {stable_mosaic.version = 11 : i64} {
  func.func @_vq_kernel(%arg0: i32, %arg1: i32, %arg2: memref<1x4x256xf32, #tpu.memory_space<vmem>>, %arg3: memref<8x4xf32, #tpu.memory_space<vmem>>, %arg4: memref<4x8xf32, #tpu.memory_space<vmem>>, %arg5: memref<8x1xf32, #tpu.memory_space<vmem>>, %arg6: memref<1x4x256xf32, #tpu.memory_space<vmem>>, %arg7: memref<1x1x256xi32, #tpu.memory_space<vmem>>, %arg8: memref<1x1x1xf32, #tpu.memory_space<vmem>>) attributes {dimension_semantics = [#tpu.dimension_semantics<parallel>, #tpu.dimension_semantics<parallel>], iteration_bounds = array<i64: 2, 1>, scalar_prefetch = 0 : i64, scratch_operands = 0 : i64, tpu.core_type = #tpu.core_type<tc>, window_params = [{transform_indices = @transform_0, window_bounds = array<i64: 1, 4, 256>}, {pipeline_mode = #tpu.pipeline_mode<synchronous>, transform_indices = @transform_1, window_bounds = array<i64: 8, 4>}, {pipeline_mode = #tpu.pipeline_mode<synchronous>, transform_indices = @transform_2, window_bounds = array<i64: 4, 8>}, {pipeline_mode = #tpu.pipeline_mode<synchronous>, transform_indices = @transform_3, window_bounds = array<i64: 8, 1>}, {transform_indices = @transform_4, window_bounds = array<i64: 1, 4, 256>}, {transform_indices = @transform_5, window_bounds = array<i64: 1, 1, 256>}, {transform_indices = @transform_6, window_bounds = array<i64: 1, 1, 1>}]} {
    %c0 = arith.constant 0 : index
    %c0_0 = arith.constant 0 : index
    %c0_1 = arith.constant 0 : index
    %0 = vector.load %arg2[%c0, %c0_0, %c0_1] : memref<1x4x256xf32, #tpu.memory_space<vmem>>, vector<1x4x256xf32>
    %1 = vector.shape_cast %0 : vector<1x4x256xf32> to vector<4x256xf32>
    %c0_2 = arith.constant 0 : index
    %c0_3 = arith.constant 0 : index
    %2 = vector.load %arg3[%c0_2, %c0_3] : memref<8x4xf32, #tpu.memory_space<vmem>>, vector<8x4xf32>
    %c0_4 = arith.constant 0 : index
    %c0_5 = arith.constant 0 : index
    %3 = vector.load %arg4[%c0_4, %c0_5] : memref<4x8xf32, #tpu.memory_space<vmem>>, vector<4x8xf32>
    %c0_6 = arith.constant 0 : index
    %c0_7 = arith.constant 0 : index
    %4 = vector.load %arg5[%c0_6, %c0_7] : memref<8x1xf32, #tpu.memory_space<vmem>>, vector<8x1xf32>
    %5 = vector.extract_strided_slice %2 {offsets = [0, 0], sizes = [8, 1], strides = [1, 1]} : vector<8x4xf32> to vector<8x1xf32>
    %6 = vector.extract_strided_slice %1 {offsets = [0, 0], sizes = [1, 256], strides = [1, 1]} : vector<4x256xf32> to vector<1x256xf32>
    %7 = vector.broadcast %5 : vector<8x1xf32> to vector<8x256xf32>
    %8 = vector.broadcast %6 : vector<1x256xf32> to vector<8x256xf32>
    %9 = arith.mulf %7, %8 : vector<8x256xf32>
    %10 = vector.extract_strided_slice %2 {offsets = [0, 1], sizes = [8, 1], strides = [1, 1]} : vector<8x4xf32> to vector<8x1xf32>
    %11 = vector.extract_strided_slice %1 {offsets = [1, 0], sizes = [1, 256], strides = [1, 1]} : vector<4x256xf32> to vector<1x256xf32>
    %12 = vector.broadcast %10 : vector<8x1xf32> to vector<8x256xf32>
    %13 = vector.broadcast %11 : vector<1x256xf32> to vector<8x256xf32>
    %14 = arith.mulf %12, %13 : vector<8x256xf32>
    %15 = arith.addf %9, %14 : vector<8x256xf32>
    %16 = vector.extract_strided_slice %2 {offsets = [0, 2], sizes = [8, 1], strides = [1, 1]} : vector<8x4xf32> to vector<8x1xf32>
    %17 = vector.extract_strided_slice %1 {offsets = [2, 0], sizes = [1, 256], strides = [1, 1]} : vector<4x256xf32> to vector<1x256xf32>
    %18 = vector.broadcast %16 : vector<8x1xf32> to vector<8x256xf32>
    %19 = vector.broadcast %17 : vector<1x256xf32> to vector<8x256xf32>
    %20 = arith.mulf %18, %19 : vector<8x256xf32>
    %21 = arith.addf %15, %20 : vector<8x256xf32>
    %22 = vector.extract_strided_slice %2 {offsets = [0, 3], sizes = [8, 1], strides = [1, 1]} : vector<8x4xf32> to vector<8x1xf32>
    %23 = vector.extract_strided_slice %1 {offsets = [3, 0], sizes = [1, 256], strides = [1, 1]} : vector<4x256xf32> to vector<1x256xf32>
    %24 = vector.broadcast %22 : vector<8x1xf32> to vector<8x256xf32>
    %25 = vector.broadcast %23 : vector<1x256xf32> to vector<8x256xf32>
    %26 = arith.mulf %24, %25 : vector<8x256xf32>
    %27 = arith.addf %21, %26 : vector<8x256xf32>
    %cst = arith.constant 2.000000e+00 : f32
    %28 = vector.broadcast %cst : f32 to vector<8x256xf32>
    %29 = arith.mulf %28, %27 : vector<8x256xf32>
    %30 = vector.broadcast %4 : vector<8x1xf32> to vector<8x256xf32>
    %31 = arith.subf %30, %29 : vector<8x256xf32>
    %cst_8 = arith.constant dense<0x7F800000> : vector<256xf32>
    %32 = vector.multi_reduction <minimumf>, %31, %cst_8 [0] : vector<8x256xf32> to vector<256xf32>
    %33 = vector.shape_cast %32 : vector<256xf32> to vector<1x256xf32>
    %34 = tpu.iota {dimensions = array<i32: 0>} : vector<8x256xi32>
    %35 = arith.sitofp %34 : vector<8x256xi32> to vector<8x256xf32>
    %36 = vector.broadcast %33 : vector<1x256xf32> to vector<8x256xf32>
    %37 = arith.cmpf oeq, %31, %36 : vector<8x256xf32>
    %cst_9 = arith.constant 8.000000e+00 : f32
    %38 = vector.broadcast %cst_9 : f32 to vector<8x256xf32>
    %39 = arith.select %37, %35, %38 : vector<8x256xi1>, vector<8x256xf32>
    %cst_10 = arith.constant dense<0x7F800000> : vector<256xf32>
    %40 = vector.multi_reduction <minimumf>, %39, %cst_10 [0] : vector<8x256xf32> to vector<256xf32>
    %41 = vector.shape_cast %40 : vector<256xf32> to vector<1x256xf32>
    %42 = vector.broadcast %41 : vector<1x256xf32> to vector<8x256xf32>
    %43 = arith.cmpf oeq, %35, %42 : vector<8x256xf32>
    %44 = arith.extui %43 : vector<8x256xi1> to vector<8x256xi32>
    %45 = arith.sitofp %44 : vector<8x256xi32> to vector<8x256xf32>
    %cst_11 = arith.constant dense<0.000000e+00> : vector<4x256xf32>
    %46 = tpu.matmul %3, %45, %cst_11 {dimension_numbers = #tpu.dot_dimension_numbers<[1], [0], [0], [1], [0, 0, 1, 1], [], []>} : vector<4x8xf32>, vector<8x256xf32>, vector<4x256xf32> -> vector<4x256xf32>
    %47 = vector.shape_cast %46 : vector<4x256xf32> to vector<1x4x256xf32>
    %c0_12 = arith.constant 0 : index
    %c0_13 = arith.constant 0 : index
    %c0_14 = arith.constant 0 : index
    %48 = vector.load %arg6[%c0_12, %c0_13, %c0_14] : memref<1x4x256xf32, #tpu.memory_space<vmem>>, vector<1x4x256xf32>
    tpu.vector_store %arg6[%c0_12, %c0_13, %c0_14], %47 {strides = array<i32>} : memref<1x4x256xf32, #tpu.memory_space<vmem>>, vector<1x4x256xf32>,
    %49 = arith.fptosi %41 : vector<1x256xf32> to vector<1x256xi32>
    %50 = vector.shape_cast %49 : vector<1x256xi32> to vector<1x1x256xi32>
    %c0_15 = arith.constant 0 : index
    %c0_16 = arith.constant 0 : index
    %c0_17 = arith.constant 0 : index
    %51 = vector.load %arg7[%c0_15, %c0_16, %c0_17] : memref<1x1x256xi32, #tpu.memory_space<vmem>>, vector<1x1x256xi32>
    tpu.vector_store %arg7[%c0_15, %c0_16, %c0_17], %50 {strides = array<i32>} : memref<1x1x256xi32, #tpu.memory_space<vmem>>, vector<1x1x256xi32>,
    %52 = arith.subf %46, %1 : vector<4x256xf32>
    %53 = arith.mulf %52, %52 : vector<4x256xf32>
    %54 = vector.shape_cast %53 : vector<4x256xf32> to vector<1x4x256xf32>
    %cst_18 = arith.constant dense<0.000000e+00> : vector<1xf32>
    %55 = vector.multi_reduction <add>, %54, %cst_18 [1, 2] : vector<1x4x256xf32> to vector<1xf32>
    %56 = vector.shape_cast %55 : vector<1xf32> to vector<1x1x1xf32>
    %57 = vector.extract %56[0, 0, 0] : f32 from vector<1x1x1xf32>
    %58 = vector.broadcast %57 : f32 to vector<1x1x1xf32>
    %c0_19 = arith.constant 0 : index
    %c0_20 = arith.constant 0 : index
    %c0_21 = arith.constant 0 : index
    %59 = vector.load %arg8[%c0_19, %c0_20, %c0_21] : memref<1x1x1xf32, #tpu.memory_space<vmem>>, vector<1x1x1xf32>
    tpu.vector_store %arg8[%c0_19, %c0_20, %c0_21], %58 {strides = array<i32>} : memref<1x1x1xf32, #tpu.memory_space<vmem>>, vector<1x1x1xf32>,
    return
  }
  func.func @transform_0(%arg0: i32, %arg1: i32) -> (i32, i32, i32) {
    %c0_i32 = arith.constant 0 : i32
    %c0_i32_0 = arith.constant 0 : i32
    return %arg0, %c0_i32, %arg1 : i32, i32, i32
  }
  func.func @transform_1(%arg0: i32, %arg1: i32) -> (i32, i32) {
    %c0_i32 = arith.constant 0 : i32
    %c0_i32_0 = arith.constant 0 : i32
    %c0_i32_1 = arith.constant 0 : i32
    return %c0_i32, %c0_i32_0 : i32, i32
  }
  func.func @transform_2(%arg0: i32, %arg1: i32) -> (i32, i32) {
    %c0_i32 = arith.constant 0 : i32
    %c0_i32_0 = arith.constant 0 : i32
    %c0_i32_1 = arith.constant 0 : i32
    return %c0_i32, %c0_i32_0 : i32, i32
  }
  func.func @transform_3(%arg0: i32, %arg1: i32) -> (i32, i32) {
    %c0_i32 = arith.constant 0 : i32
    %c0_i32_0 = arith.constant 0 : i32
    %c0_i32_1 = arith.constant 0 : i32
    return %c0_i32, %c0_i32_0 : i32, i32
  }
  func.func @transform_4(%arg0: i32, %arg1: i32) -> (i32, i32, i32) {
    %c0_i32 = arith.constant 0 : i32
    %c0_i32_0 = arith.constant 0 : i32
    return %arg0, %c0_i32, %arg1 : i32, i32, i32
  }
  func.func @transform_5(%arg0: i32, %arg1: i32) -> (i32, i32, i32) {
    %c0_i32 = arith.constant 0 : i32
    %c0_i32_0 = arith.constant 0 : i32
    return %arg0, %c0_i32, %arg1 : i32, i32, i32
  }
  func.func @transform_6(%arg0: i32, %arg1: i32) -> (i32, i32, i32) {
    %c1_i32 = arith.constant 1 : i32
    %0 = arith.muli %arg0, %c1_i32 : i32
    %1 = arith.addi %0, %arg1 : i32
    %c0_i32 = arith.constant 0 : i32
    %c0_i32_0 = arith.constant 0 : i32
    %c0_i32_1 = arith.constant 0 : i32
    return %1, %c0_i32, %c0_i32_0 : i32, i32, i32
  }
}

</mosaic_0001>

<llo_original>
// kernel: vector_quantizer_forward.1
$region0: #{vector_quantizer_forward.1}
  #allocation0 [shape = 'u32[]', space=smem, size = 0x4, offset = 0x4, fixed_abs, tag = 'smem constant byte address 0x4 - core index']
  #allocation1 [shape = 'u32[144,128]{1,0:T(1,128)}', space=vmem, size = 0x12000, scoped, tag = 'internal scratch']
  %s0 = inlined_call_operand.vmem [shape: f32[2,4,256], index: 0, kind: input, shape index: {}]
  %s1 = inlined_call_operand.vmem [shape: f32[8,4], index: 1, kind: input, shape index: {}]
  %s2 = inlined_call_operand.vmem [shape: f32[4,8], index: 2, kind: input, shape index: {}]
  %s3 = inlined_call_operand.vmem [shape: f32[8,1], index: 3, kind: input, shape index: {}]
  %s4 = inlined_call_operand.vmem [shape: f32[2,4,256], index: 4, kind: output, shape index: {0}]
  %s5 = inlined_call_operand.vmem [shape: s32[2,1,256], index: 5, kind: output, shape index: {1}]
  %s6 = inlined_call_operand.vmem [shape: f32[2,1,1], index: 6, kind: output, shape index: {2}]
  %7 = xla_tuple %s4, %s5, %s6
  %s8 = sld [smem:[#allocation0]]
  $region65: #{vector_quantizer_forward.1} parent=0
    _
  %s10 = ssub.s32 1, %s8
  %s11 = scalar_select 0, %s10, %s8
  loop: start=0, step=1, limit=4
  $region2: #{vector_quantizer_forward.1} parent=0 // loop_pre_header
    _
  $region3: #{vector_quantizer_forward.1} parent=0 // loop_header
    %s13 = sphi 0, %s17
    %p14 = scmp.ge.s32.totalorder %s13, 4
    %s20 = sphi 0, %s32
    %s21 = sphi 0, %s28
    %s22 = sphi 0, %s20
    %s23 = sphi 0, %s21
    %s24 = sphi 0, %s22
    %s25 = sphi 0, %s23
    %s37 = sphi 0, %s39
    %s40 = sphi 0, %s37
    %s41 = sphi 0, %s40
    %s57 = sphi 0, %s41
    %s61 = sphi 0, %s61
    %s63 = sphi 0, %s61
    %s64 = sphi 0, %s63
    %s78 = sphi 0, %s64
    %s82 = sphi 0, %s82
    %s84 = sphi 0, %s82
    %s85 = sphi 0, %s84
    %s99 = sphi 0, %s85
    %s103 = sphi 0, %s103
    %s105 = sphi 0, %s103
    %s106 = sphi 0, %s105
    %s120 = sphi 0, %s106
    %s128 = sphi 0, %s130
    %s131 = sphi 0, %s128
    %s132 = sphi 0, %s131
    %s148 = sphi 0, %s132
    %s156 = sphi 0, %s158
    %s159 = sphi 0, %s156
    %s160 = sphi 0, %s159
    %s176 = sphi 0, %s160
    %s184 = sphi 0, %s186
    %s187 = sphi 0, %s184
    %s188 = sphi 0, %s187
    %s204 = sphi 0, %s188
  $region4: #{vector_quantizer_forward.1} parent=0 // loop_header_branch
    %16 = sbr.rel (%p14) target = $region8
  $region5: #{vector_quantizer_forward.1} parent=0 // loop_body
    %s18 = ssub.s32 %s13, 1
    %s19 = ssub.s32 %s13, 2
    %s26 = sadd.s32 1, %s21
    %p27 = scmp.ge.s32.totalorder %s26, 1
    %s28 = scalar_select %p27, 0, %s26
    %s29 = sadd.s32 1, %s20
    %s30 = scalar_select %p27, %s29, %s20
    %p31 = scmp.ge.s32.totalorder %s30, 2
    %s32 = scalar_select %p31, 0, %s30
    %s33 = ssub.s32 %s20, %s32
    %s34 = ssub.s32 %s21, %s28
    %s35 = sor.u32 %s33, %s34
    %p36 = scmp.eq.s32.totalorder %s35, 0
    %s38 = sadd.s32 %s37, 1
    %s39 = scalar_select %p36, %s37, %s38
    %p42 = pneg %p36
    %p43 = scmp.eq.s32.totalorder %s13, 1
    %p44 = por %p42, %p43
    %p45 = scmp.ne.s32.totalorder %s37, %s40
    %p46 = scmp.eq.s32.totalorder %s13, 0
    %p47 = por %p45, %p46
    %p48 = scmp.ne.s32.totalorder %s37, %s40
    %p49 = scmp.eq.s32.totalorder %s18, 1
    %p50 = por %p48, %p49
    %p51 = scmp.ne.s32.totalorder %s40, %s41
    %p52 = scmp.eq.s32.totalorder %s18, 0
    %p53 = por %p51, %p52
    %p54 = scmp.ne.s32.totalorder %s40, %s41
    %p55 = scmp.eq.s32.totalorder %s19, 1
    %p56 = por %p54, %p55
    %p58 = scmp.ne.s32.totalorder %s41, %s57
    %p59 = scmp.eq.s32.totalorder %s19, 0
    %p60 = por %p58, %p59
    %s62 = sadd.s32 %s61, 1
    %p65 = scmp.eq.s32.totalorder %s13, 1
    %p66 = scmp.ne.s32.totalorder %s61, %s63
    %p67 = scmp.eq.s32.totalorder %s13, 0
    %p68 = por %p66, %p67
    %p69 = scmp.ne.s32.totalorder %s61, %s63
    %p70 = scmp.eq.s32.totalorder %s18, 1
    %p71 = por %p69, %p70
    %p72 = scmp.ne.s32.totalorder %s63, %s64
    %p73 = scmp.eq.s32.totalorder %s18, 0
    %p74 = por %p72, %p73
    %p75 = scmp.ne.s32.totalorder %s63, %s64
    %p76 = scmp.eq.s32.totalorder %s19, 1
    %p77 = por %p75, %p76
    %p79 = scmp.ne.s32.totalorder %s64, %s78
    %p80 = scmp.eq.s32.totalorder %s19, 0
    %p81 = por %p79, %p80
    %s83 = sadd.s32 %s82, 1
    %p86 = scmp.eq.s32.totalorder %s13, 1
    %p87 = scmp.ne.s32.totalorder %s82, %s84
    %p88 = scmp.eq.s32.totalorder %s13, 0
    %p89 = por %p87, %p88
    %p90 = scmp.ne.s32.totalorder %s82, %s84
    %p91 = scmp.eq.s32.totalorder %s18, 1
    %p92 = por %p90, %p91
    %p93 = scmp.ne.s32.totalorder %s84, %s85
    %p94 = scmp.eq.s32.totalorder %s18, 0
    %p95 = por %p93, %p94
    %p96 = scmp.ne.s32.totalorder %s84, %s85
    %p97 = scmp.eq.s32.totalorder %s19, 1
    %p98 = por %p96, %p97
    %p100 = scmp.ne.s32.totalorder %s85, %s99
    %p101 = scmp.eq.s32.totalorder %s19, 0
    %p102 = por %p100, %p101
    %s104 = sadd.s32 %s103, 1
    %p107 = scmp.eq.s32.totalorder %s13, 1
    %p108 = scmp.ne.s32.totalorder %s103, %s105
    %p109 = scmp.eq.s32.totalorder %s13, 0
    %p110 = por %p108, %p109
    %p111 = scmp.ne.s32.totalorder %s103, %s105
    %p112 = scmp.eq.s32.totalorder %s18, 1
    %p113 = por %p111, %p112
    %p114 = scmp.ne.s32.totalorder %s105, %s106
    %p115 = scmp.eq.s32.totalorder %s18, 0
    %p116 = por %p114, %p115
    %p117 = scmp.ne.s32.totalorder %s105, %s106
    %p118 = scmp.eq.s32.totalorder %s19, 1
    %p119 = por %p117, %p118
    %p121 = scmp.ne.s32.totalorder %s106, %s120
    %p122 = scmp.eq.s32.totalorder %s19, 0
    %p123 = por %p121, %p122
    %s124 = ssub.s32 %s20, %s32
    %s125 = ssub.s32 %s21, %s28
    %s126 = sor.u32 %s124, %s125
    %p127 = scmp.eq.s32.totalorder %s126, 0
    %s129 = sadd.s32 %s128, 1
    %s130 = scalar_select %p127, %s128, %s129
    %p133 = pneg %p127
    %p134 = scmp.eq.s32.totalorder %s13, 1
    %p135 = por %p133, %p134
    %p136 = scmp.ne.s32.totalorder %s128, %s131
    %p137 = scmp.eq.s32.totalorder %s13, 0
    %p138 = por %p136, %p137
    %p139 = scmp.ne.s32.totalorder %s128, %s131
    %p140 = scmp.eq.s32.totalorder %s18, 1
    %p141 = por %p139, %p140
    %p142 = scmp.ne.s32.totalorder %s131, %s132
    %p143 = scmp.eq.s32.totalorder %s18, 0
    %p144 = por %p142, %p143
    %p145 = scmp.ne.s32.totalorder %s131, %s132
    %p146 = scmp.eq.s32.totalorder %s19, 1
    %p147 = por %p145, %p146
    %p149 = scmp.ne.s32.totalorder %s132, %s148
    %p150 = scmp.eq.s32.totalorder %s19, 0
    %p151 = por %p149, %p150
    %s152 = ssub.s32 %s20, %s32
    %s153 = ssub.s32 %s21, %s28
    %s154 = sor.u32 %s152, %s153
    %p155 = scmp.eq.s32.totalorder %s154, 0
    %s157 = sadd.s32 %s156, 1
    %s158 = scalar_select %p155, %s156, %s157
    %p161 = pneg %p155
    %p162 = scmp.eq.s32.totalorder %s13, 1
    %p163 = por %p161, %p162
    %p164 = scmp.ne.s32.totalorder %s156, %s159
    %p165 = scmp.eq.s32.totalorder %s13, 0
    %p166 = por %p164, %p165
    %p167 = scmp.ne.s32.totalorder %s156, %s159
    %p168 = scmp.eq.s32.totalorder %s18, 1
    %p169 = por %p167, %p168
    %p170 = scmp.ne.s32.totalorder %s159, %s160
    %p171 = scmp.eq.s32.totalorder %s18, 0
    %p172 = por %p170, %p171
    %p173 = scmp.ne.s32.totalorder %s159, %s160
    %p174 = scmp.eq.s32.totalorder %s19, 1
    %p175 = por %p173, %p174
    %p177 = scmp.ne.s32.totalorder %s160, %s176
    %p178 = scmp.eq.s32.totalorder %s19, 0
    %p179 = por %p177, %p178
    %s180 = sadd.s32 %s20, %s21
    %s181 = sadd.s32 %s32, %s28
    %s182 = ssub.s32 %s180, %s181
    %p183 = scmp.eq.s32.totalorder %s182, 0
    %s185 = sadd.s32 %s184, 1
    %s186 = scalar_select %p183, %s184, %s185
    %p189 = pneg %p183
    %p190 = scmp.eq.s32.totalorder %s13, 1
    %p191 = por %p189, %p190
    %p192 = scmp.ne.s32.totalorder %s184, %s187
    %p193 = scmp.eq.s32.totalorder %s13, 0
    %p194 = por %p192, %p193
    %p195 = scmp.ne.s32.totalorder %s184, %s187
    %p196 = scmp.eq.s32.totalorder %s18, 1
    %p197 = por %p195, %p196
    %p198 = scmp.ne.s32.totalorder %s187, %s188
    %p199 = scmp.eq.s32.totalorder %s18, 0
    %p200 = por %p198, %p199
    %p201 = scmp.ne.s32.totalorder %s187, %s188
    %p202 = scmp.eq.s32.totalorder %s19, 1
    %p203 = por %p201, %p202
    %p205 = scmp.ne.s32.totalorder %s188, %s204
    %p206 = scmp.eq.s32.totalorder %s19, 0
    %p207 = por %p205, %p206
    %p208 = scmp.le.s32.totalorder 1, %s13
    %p209 = scmp.lt.s32.totalorder %s13, 3
    %p210 = pnand %p208, %p209
    %p211 = pneg %p210
    // Predicated region
    $region9: #{vector_quantizer_forward.1} parent=5 // pred_check
      _
    $region10: #{vector_quantizer_forward.1} parent=5 // pred_check_branch
      %213 = sbr.rel (%p210) target = $region12
    $region11: #{vector_quantizer_forward.1} parent=5 // pred_region
      %s214 = ssub.s32 %s13, 1
      // Predicated region
      $region13: #{vector_quantizer_forward.1} parent=11 // pred_check
        %p215 = pneg %p74
      $region14: #{vector_quantizer_forward.1} parent=11 // pred_check_branch
        %217 = sbr.rel (%p215) target = $region16
      $region15: #{vector_quantizer_forward.1} parent=11 // pred_region
        _
      $region16: #{vector_quantizer_forward.1} parent=11 // pred_fallthru
        _
      // Predicated region
      $region17: #{vector_quantizer_forward.1} parent=11 // pred_check
        %p218 = pneg %p95
      $region18: #{vector_quantizer_forward.1} parent=11 // pred_check_branch
        %220 = sbr.rel (%p218) target = $region20
      $region19: #{vector_quantizer_forward.1} parent=11 // pred_region
        _
      $region20: #{vector_quantizer_forward.1} parent=11 // pred_fallthru
        _
      // Predicated region
      $region21: #{vector_quantizer_forward.1} parent=11 // pred_check
        %p221 = pneg %p116
      $region22: #{vector_quantizer_forward.1} parent=11 // pred_check_branch
        %223 = sbr.rel (%p221) target = $region24
      $region23: #{vector_quantizer_forward.1} parent=11 // pred_region
        _
      $region24: #{vector_quantizer_forward.1} parent=11 // pred_fallthru
        _
    $region12: #{vector_quantizer_forward.1} parent=5 // pred_fallthru
      _
    %p224 = scmp.lt.s32.totalorder %s13, 2
    // Predicated region
    $region25: #{vector_quantizer_forward.1} parent=5 // pred_check
      %p225 = pneg %p224
    $region26: #{vector_quantizer_forward.1} parent=5 // pred_check_branch
      %227 = sbr.rel (%p225) target = $region28
    $region27: #{vector_quantizer_forward.1} parent=5 // pred_region
      // Predicated region
      $region29: #{vector_quantizer_forward.1} parent=27 // pred_check
        %p228 = pneg %p47
      $region30: #{vector_quantizer_forward.1} parent=27 // pred_check_branch
        %230 = sbr.rel (%p228) target = $region32
      $region31: #{vector_quantizer_forward.1} parent=27 // pred_region
        %s231 = smul.u32 2, %s21
        %p232 = scmp.lt.s32.totalorder %s20, 1
        %s233 = scalar_select %p232, %s20, 1
        %p234 = scmp.lt.s32.totalorder %s231, 1
        %s235 = scalar_select %p234, %s231, 1
        %s236 = smul.addr %s233, 2
        %s237 = sadd.s32 %s235, %s236
        %s238 = smul.addr %s237, 4
        %s239 = scalar_lea.vmem %s0, %s238
        %s240 = smul.u32 2, %s21
      $region32: #{vector_quantizer_forward.1} parent=27 // pred_fallthru
        _
    $region28: #{vector_quantizer_forward.1} parent=5 // pred_fallthru
      _
    %p241 = scmp.le.s32.totalorder 1, %s13
    %p242 = scmp.lt.s32.totalorder %s13, 3
    %p243 = pnand %p241, %p242
    %p244 = pneg %p243
    // Predicated region
    $region33: #{vector_quantizer_forward.1} parent=5 // pred_check
      _
    $region34: #{vector_quantizer_forward.1} parent=5 // pred_check_branch
      %246 = sbr.rel (%p243) target = $region36
    $region35: #{vector_quantizer_forward.1} parent=5 // pred_region
      %s247 = ssub.s32 %s13, 1
      %s248 = smul.u32 2, %s23
      %p249 = scmp.lt.s32.totalorder %s22, 1
      %s250 = scalar_select %p249, %s22, 1
      %p251 = scmp.lt.s32.totalorder %s248, 1
      %s252 = scalar_select %p251, %s248, 1
      %s253 = smul.addr %s250, 2
      %s254 = sadd.s32 %s252, %s253
      %s255 = smul.addr %s254, 4
      %s256 = scalar_lea.vmem %s0, %s255
      %p257 = pneg %p53
      %p258 = pneg %p50
      %p259 = pneg %p74
      %p260 = pneg %p71
      %p261 = pneg %p95
      %p262 = pneg %p92
      %p263 = pneg %p116
      %p264 = pneg %p113
      %p265 = pneg %p144
      %p266 = pneg %p141
      %s267 = smul.u32 2, %s23
      %p268 = scmp.lt.s32.totalorder %s22, 1
      %s269 = scalar_select %p268, %s22, 1
      %p270 = scmp.lt.s32.totalorder %s267, 1
      %s271 = scalar_select %p270, %s267, 1
      %s272 = smul.addr %s269, 2
      %s273 = sadd.s32 %s271, %s272
      %s274 = smul.addr %s273, 4
      %s275 = scalar_lea.vmem %s4, %s274
      %p276 = pneg %p172
      %p277 = pneg %p169
      %s278 = smul.u32 2, %s23
      %p279 = scmp.lt.s32.totalorder %s22, 1
      %s280 = scalar_select %p279, %s22, 1
      %p281 = scmp.lt.s32.totalorder %s278, 1
      %s282 = scalar_select %p281, %s278, 1
      %s283 = smul.addr %s280, 2
      %s284 = sadd.s32 %s282, %s283
      %s285 = scalar_lea.vmem %s5, %s284
      %p286 = pneg %p200
      %p287 = pneg %p197
      %s288 = sadd.s32 %s22, %s23
      %p289 = scmp.lt.s32.totalorder %s288, 1
      %s290 = scalar_select %p289, %s288, 1
      %s291 = scalar_lea.vmem %s6, %s290
      %s292 = smul.u32 2, %s23
      %p293 = scmp.lt.s32.totalorder %s22, 1
      %s294 = scalar_select %p293, %s22, 1
      %p295 = scmp.lt.s32.totalorder %s292, 1
      %s296 = scalar_select %p295, %s292, 1
      %s297 = smul.addr %s294, 2
      %s298 = sadd.s32 %s296, %s297
      %s299 = smul.addr %s298, 4
      %s300 = scalar_lea.vmem %s0, %s299
      %s301 = smul.u32 2, %s23
      %s302 = smul.u32 2, %s23
      %p303 = scmp.lt.s32.totalorder %s22, 1
      %s304 = scalar_select %p303, %s22, 1
      %p305 = scmp.lt.s32.totalorder %s302, 1
      %s306 = scalar_select %p305, %s302, 1
      %s307 = smul.addr %s304, 2
      %s308 = sadd.s32 %s306, %s307
      %s309 = smul.addr %s308, 4
      %s310 = scalar_lea.vmem %s4, %s309
      %s311 = smul.u32 2, %s23
      %s312 = smul.u32 2, %s23
      %p313 = scmp.lt.s32.totalorder %s22, 1
      %s314 = scalar_select %p313, %s22, 1
      %p315 = scmp.lt.s32.totalorder %s312, 1
      %s316 = scalar_select %p315, %s312, 1
      %s317 = smul.addr %s314, 2
      %s318 = sadd.s32 %s316, %s317
      %s319 = scalar_lea.vmem %s5, %s318
      %s320 = smul.u32 2, %s23
      %s321 = sadd.s32 %s22, %s23
      %p322 = scmp.lt.s32.totalorder %s321, 1
      %s323 = scalar_select %p322, %s321, 1
      %s324 = scalar_lea.vmem %s6, %s323
      %s325 = sadd.s32 %s22, %s23
      %v326 = vld [vmem:[%s300] sm:$0xff]
      %v327 = vld [vmem:[%s1] sm:$0xff]
      %v328 = vld [vmem:[%s2] sm:$0xf]
      %v329 = vld [vmem:[%s3] sm:$0xff]
      %331 = vset.pattern.permute.xlu0 0
      %332 = vperm.xlu0 %331, %v327
      %v333 = vpop.permute.xlu0 %332
      %v336 = vlaneseq
      %v337 = vshrl.u32 %v336, 7
      %v338 = vsub.s32 0, %v337
      %v339 = vrot.slane %v326, %v338
      %v340 = vlaneseq
      %v341 = vshrl.u32 %v340, 7
      %v342 = vsub.s32 4, %v341
      %v343 = vrot.slane %v326, %v342
      %v346 = vlaneseq
      %v347 = vshrl.u32 %v346, 7
      %v348 = vsub.s32 0, %v347
      %v349 = vrot.slane %v339, %v348
      %v350 = vlaneseq
      %v351 = vshrl.u32 %v350, 7
      %v352 = vsub.s32 0, %v351
      %v353 = vrot.slane %v343, %v352
      %v354 = vmul.f32 %v333, %v349
      %v355 = vmul.f32 %v333, %v353
      %356 = vset.pattern.permute.xlu0 1
      %357 = vperm.xlu0 %356, %v327
      %v358 = vpop.permute.xlu0 %357
      %v360 = vlaneseq
      %v361 = vshrl.u32 %v360, 7
      %v362 = vsub.s32 1, %v361
      %v363 = vrot.slane %v326, %v362
      %v364 = vlaneseq
      %v365 = vshrl.u32 %v364, 7
      %v366 = vsub.s32 5, %v365
      %v367 = vrot.slane %v326, %v366
      %v370 = vlaneseq
      %v371 = vshrl.u32 %v370, 7
      %v372 = vsub.s32 1, %v371
      %v373 = vrot.slane %v363, %v372
      %v374 = vlaneseq
      %v375 = vshrl.u32 %v374, 7
      %v376 = vsub.s32 1, %v375
      %v377 = vrot.slane %v367, %v376
      %v378 = vmul.f32 %v358, %v373
      %v379 = vmul.f32 %v358, %v377
      %v380 = vadd.f32 %v354, %v378
      %v381 = vadd.f32 %v355, %v379
      %382 = vset.pattern.permute.xlu0 2
      %383 = vperm.xlu0 %382, %v327
      %v384 = vpop.permute.xlu0 %383
      %v386 = vlaneseq
      %v387 = vshrl.u32 %v386, 7
      %v388 = vsub.s32 2, %v387
      %v389 = vrot.slane %v326, %v388
      %v390 = vlaneseq
      %v391 = vshrl.u32 %v390, 7
      %v392 = vsub.s32 6, %v391
      %v393 = vrot.slane %v326, %v392
      %v396 = vlaneseq
      %v397 = vshrl.u32 %v396, 7
      %v398 = vsub.s32 2, %v397
      %v399 = vrot.slane %v389, %v398
      %v400 = vlaneseq
      %v401 = vshrl.u32 %v400, 7
      %v402 = vsub.s32 2, %v401
      %v403 = vrot.slane %v393, %v402
      %v404 = vmul.f32 %v384, %v399
      %v405 = vmul.f32 %v384, %v403
      %v406 = vadd.f32 %v380, %v404
      %v407 = vadd.f32 %v381, %v405
      %408 = vset.pattern.permute.xlu0 3
      %409 = vperm.xlu0 %408, %v327
      %v410 = vpop.permute.xlu0 %409
      %v412 = vlaneseq
      %v413 = vshrl.u32 %v412, 7
      %v414 = vsub.s32 3, %v413
      %v415 = vrot.slane %v326, %v414
      %v416 = vlaneseq
      %v417 = vshrl.u32 %v416, 7
      %v418 = vsub.s32 7, %v417
      %v419 = vrot.slane %v326, %v418
      %v422 = vlaneseq
      %v423 = vshrl.u32 %v422, 7
      %v424 = vsub.s32 3, %v423
      %v425 = vrot.slane %v415, %v424
      %v426 = vlaneseq
      %v427 = vshrl.u32 %v426, 7
      %v428 = vsub.s32 3, %v427
      %v429 = vrot.slane %v419, %v428
      %v430 = vmul.f32 %v410, %v425
      %v431 = vmul.f32 %v410, %v429
      %v432 = vadd.f32 %v406, %v430
      %v433 = vadd.f32 %v407, %v431
      %v434 = vmul.f32 %v432, 2.0
      %v435 = vmul.f32 %v433, 2.0
      %437 = vset.pattern.permute.xlu0 0
      %438 = vperm.xlu0 %437, %v329
      %v439 = vpop.permute.xlu0 %438
      %v441 = vsub.f32 %v439, %v434
      %v442 = vsub.f32 %v439, %v435
      %v443 = vrot.slane %v441, 4
      %v444 = vmin.f32 %v441, %v443
      %v445 = vrot.slane %v444, 2
      %v446 = vmin.f32 %v444, %v445
      %v447 = vrot.slane %v446, 1
      %v448 = vmin.f32 %v446, %v447
      %v449 = vrot.slane %v442, 4
      %v450 = vmin.f32 %v442, %v449
      %v451 = vrot.slane %v450, 2
      %v452 = vmin.f32 %v450, %v451
      %v453 = vrot.slane %v452, 1
      %v454 = vmin.f32 %v452, %v453
      %v455 = vlaneseq
      %v456 = vshrl.u32 %v455, 7
      %v457 = vcvt.s32.f32 %v456
      %vm458 = vcmp.eq.f32.partialorder %v441, %v448
      %vm459 = vcmp.eq.f32.partialorder %v442, %v454
      %v460 = vsel %vm458, %v457, 8.0
      %v461 = vsel %vm459, %v457, 8.0
      %v462 = vrot.slane %v460, 4
      %v463 = vmin.f32 %v460, %v462
      %v464 = vrot.slane %v463, 2
      %v465 = vmin.f32 %v463, %v464
      %v466 = vrot.slane %v465, 1
      %v467 = vmin.f32 %v465, %v466
      %v468 = vrot.slane %v461, 4
      %v469 = vmin.f32 %v461, %v468
      %v470 = vrot.slane %v469, 2
      %v471 = vmin.f32 %v469, %v470
      %v472 = vrot.slane %v471, 1
      %v473 = vmin.f32 %v471, %v472
      %vm474 = vcmp.eq.f32.partialorder %v457, %v467
      %vm475 = vcmp.eq.f32.partialorder %v457, %v473
      %v476 = vsel %vm474, 1, 0
      %v477 = vsel %vm475, 1, 0
      %v478 = vcvt.s32.f32 %v476
      %v479 = vcvt.s32.f32 %v477
      %vm480 = vcmask 64512
      %v482 = vsel %vm480, %v328, 0
      %484 = vmatprep.subr.mxu0 %v479
      %485 = vmatpush1.msra.mxu0 %v478
      %486 = vmatprep.subr.mxu0 0.0
      %487 = vmatpush1.msra.mxu0 0.0
      %488 = vmatprep.subr.mxu0 0.0
      %489 = vmatpush1.msra.mxu0 0.0
      %490 = vmatprep.subr.mxu0 0.0
      %491 = vmatpush1.msra.mxu0 0.0
      %492 = vmatprep.subr.mxu0 0.0
      %493 = vmatpush1.msra.mxu0 0.0
      %494 = vmatprep.subr.mxu0 0.0
      %495 = vmatpush1.msra.mxu0 0.0
      %496 = vmatprep.subr.mxu0 0.0
      %497 = vmatpush1.msra.mxu0 0.0
      %498 = vmatprep.subr.mxu0 0.0
      %499 = vmatpush1.msra.mxu0 0.0
      %500 = vmatprep.subr.mxu0 0.0
      %501 = vmatpush1.msra.mxu0 0.0
      %502 = vmatprep.subr.mxu0 0.0
      %503 = vmatpush1.msra.mxu0 0.0
      %504 = vmatprep.subr.mxu0 0.0
      %505 = vmatpush1.msra.mxu0 0.0
      %506 = vmatprep.subr.mxu0 0.0
      %507 = vmatpush1.msra.mxu0 0.0
      %508 = vmatprep.subr.mxu0 0.0
      %509 = vmatpush1.msra.mxu0 0.0
      %510 = vmatprep.subr.mxu0 0.0
      %511 = vmatpush1.msra.mxu0 0.0
      %512 = vmatprep.subr.mxu0 0.0
      %513 = vmatpush1.msra.mxu0 0.0
      %514 = vmatprep.subr.mxu0 0.0
      %515 = vmatpush1.msra.mxu0 0.0
      %516 = vmatprep.subr.mxu0 0.0
      %517 = vmatpush1.msra.mxu0 0.0
      %518 = vmatprep.subr.mxu0 0.0
      %519 = vmatpush1.msra.mxu0 0.0
      %520 = vmatprep.subr.mxu0 0.0
      %521 = vmatpush1.msra.mxu0 0.0
      %522 = vmatprep.subr.mxu0 0.0
      %523 = vmatpush1.msra.mxu0 0.0
      %524 = vmatprep.subr.mxu0 0.0
      %525 = vmatpush1.msra.mxu0 0.0
      %526 = vmatprep.subr.mxu0 0.0
      %527 = vmatpush1.msra.mxu0 0.0
      %528 = vmatprep.subr.mxu0 0.0
      %529 = vmatpush1.msra.mxu0 0.0
      %530 = vmatprep.subr.mxu0 0.0
      %531 = vmatpush1.msra.mxu0 0.0
      %532 = vmatprep.subr.mxu0 0.0
      %533 = vmatpush1.msra.mxu0 0.0
      %534 = vmatprep.subr.mxu0 0.0
      %535 = vmatpush1.msra.mxu0 0.0
      %536 = vmatprep.subr.mxu0 0.0
      %537 = vmatpush1.msra.mxu0 0.0
      %538 = vmatprep.subr.mxu0 0.0
      %539 = vmatpush1.msra.mxu0 0.0
      %540 = vmatprep.subr.mxu0 0.0
      %541 = vmatpush1.msra.mxu0 0.0
      %542 = vmatprep.subr.mxu0 0.0
      %543 = vmatpush1.msra.mxu0 0.0
      %544 = vmatprep.subr.mxu0 0.0
      %545 = vmatpush1.msra.mxu0 0.0
      %546 = vmatprep.subr.mxu0 0.0
      %547 = vmatpush1.msra.mxu0 0.0
      %548 = vmatprep.mubr.f32.mxu0 0.0
      %549 = vmatmul.mubr.f32.gmra.mrb[0].mxu0 %v482
      %v550 = vpop.f32.mrb[0].mxu0
      %v551 = vadd.f32 0.0, %v550
      %v552 = vpop.f32.mrb[0].mxu0
      %v553 = vadd.f32 0.0, %v552
      %554 = vdwg.mxu0
      %v557 = vcombine.low %v551, %v553
      %559 = vst [vmem:[%s310] sm:$0xff] %v557
      %v560 = vcvt.f32.s32.to.zero.pseudo %v467
      %v561 = vcvt.f32.s32.to.zero.pseudo %v473
      %v562 = vcombine.low %v560, %v561
      %v564 = vunpack.c.l.s4 1966171168
      %v565 = vunpack.c.0.s8 %v564
      %v566 = vlaneseq
      %v567 = vshrl.u32 %v566, 7
      %v568 = vsub.s32 %v565, %v567
      %v569 = vrot.slane %v562, %v568
      %v571 = vunpack.c.l.s4 1966171168
      %v572 = vunpack.c.0.s8 %v571
      %v573 = vlaneseq
      %v574 = vshrl.u32 %v573, 7
      %v575 = vsub.s32 %v572, %v574
      %v576 = vrot.slane %v569, %v575
      %v577 = vlaneseq
      %vm578 = vcmp.ge.s32.totalorder %v577, 0
      %vm579 = vcmp.lt.s32.totalorder %v577, 256
      %vm580 = vmand %vm578, %vm579
      %581 = vst.msk [vmem:[%s319] sm:$0x3] %vm580, %v576
      %v582 = vcombine.high %v326, %v326
      %v584 = vsub.f32 %v551, %v326
      %v585 = vsub.f32 %v553, %v582
      %v586 = vmul.f32 %v584, %v584
      %v587 = vmul.f32 %v585, %v585
      %vm588 = vcmask 1043456
      %v589 = vsel %vm588, %v586, 0.0
      %v590 = vsel %vm588, %v587, 0.0
      %v591 = vadd.f32 %v589, %v590
      %592 = vadd.xlane.f32.xlu0 %v591
      %v593 = vpop.xlane.xlu0 %592
      %v594 = vrot.slane %v593, 4
      %v595 = vadd.f32 %v593, %v594
      %v596 = vrot.slane %v595, 2
      %v597 = vadd.f32 %v595, %v596
      %v598 = vrot.slane %v597, 1
      %v599 = vadd.f32 %v597, %v598
      %s600 = vtos %v599
      %v601 = vstv %s600
      %vm602 = vcmask 0
      %603 = vst.msk [vmem:[%s324] sm:$0x1] %vm602, %v601
      %s604 = smul.u32 2, %s23
      %p605 = scmp.lt.s32.totalorder %s22, 1
      %s606 = scalar_select %p605, %s22, 1
      %p607 = scmp.lt.s32.totalorder %s604, 1
      %s608 = scalar_select %p607, %s604, 1
      %s609 = smul.addr %s606, 2
      %s610 = sadd.s32 %s608, %s609
      %s611 = smul.addr %s610, 4
      %s612 = scalar_lea.vmem %s4, %s611
      %s613 = smul.u32 2, %s23
      %p614 = scmp.lt.s32.totalorder %s22, 1
      %s615 = scalar_select %p614, %s22, 1
      %p616 = scmp.lt.s32.totalorder %s613, 1
      %s617 = scalar_select %p616, %s613, 1
      %s618 = smul.addr %s615, 2
      %s619 = sadd.s32 %s617, %s618
      %s620 = scalar_lea.vmem %s5, %s619
      %s621 = sadd.s32 %s22, %s23
      %p622 = scmp.lt.s32.totalorder %s621, 1
      %s623 = scalar_select %p622, %s621, 1
      %s624 = scalar_lea.vmem %s6, %s623
      // Predicated region
      $region37: #{vector_quantizer_forward.1} parent=35 // pred_check
        %p625 = pneg %p141
      $region38: #{vector_quantizer_forward.1} parent=35 // pred_check_branch
        %627 = sbr.rel (%p625) target = $region40
      $region39: #{vector_quantizer_forward.1} parent=35 // pred_region
        %s628 = smul.u32 2, %s23
      $region40: #{vector_quantizer_forward.1} parent=35 // pred_fallthru
        _
      // Predicated region
      $region41: #{vector_quantizer_forward.1} parent=35 // pred_check
        %p629 = pneg %p169
      $region42: #{vector_quantizer_forward.1} parent=35 // pred_check_branch
        %631 = sbr.rel (%p629) target = $region44
      $region43: #{vector_quantizer_forward.1} parent=35 // pred_region
        %s632 = smul.u32 2, %s23
      $region44: #{vector_quantizer_forward.1} parent=35 // pred_fallthru
        _
      // Predicated region
      $region45: #{vector_quantizer_forward.1} parent=35 // pred_check
        %p633 = pneg %p197
      $region46: #{vector_quantizer_forward.1} parent=35 // pred_check_branch
        %635 = sbr.rel (%p633) target = $region48
      $region47: #{vector_quantizer_forward.1} parent=35 // pred_region
        %s636 = sadd.s32 %s22, %s23
      $region48: #{vector_quantizer_forward.1} parent=35 // pred_fallthru
        _
    $region36: #{vector_quantizer_forward.1} parent=5 // pred_fallthru
      _
    %p637 = scmp.le.s32.totalorder 2, %s13
    // Predicated region
    $region49: #{vector_quantizer_forward.1} parent=5 // pred_check
      %p638 = pneg %p637
    $region50: #{vector_quantizer_forward.1} parent=5 // pred_check_branch
      %640 = sbr.rel (%p638) target = $region52
    $region51: #{vector_quantizer_forward.1} parent=5 // pred_region
      %s641 = ssub.s32 %s13, 2
      // Predicated region
      $region53: #{vector_quantizer_forward.1} parent=51 // pred_check
        %p642 = pneg %p147
      $region54: #{vector_quantizer_forward.1} parent=51 // pred_check_branch
        %644 = sbr.rel (%p642) target = $region56
      $region55: #{vector_quantizer_forward.1} parent=51 // pred_region
        %s645 = smul.u32 2, %s25
        %p646 = scmp.lt.s32.totalorder %s24, 1
        %s647 = scalar_select %p646, %s24, 1
        %p648 = scmp.lt.s32.totalorder %s645, 1
        %s649 = scalar_select %p648, %s645, 1
        %s650 = smul.addr %s647, 2
        %s651 = sadd.s32 %s649, %s650
        %s652 = smul.addr %s651, 4
        %s653 = scalar_lea.vmem %s4, %s652
      $region56: #{vector_quantizer_forward.1} parent=51 // pred_fallthru
        _
      // Predicated region
      $region57: #{vector_quantizer_forward.1} parent=51 // pred_check
        %p654 = pneg %p175
      $region58: #{vector_quantizer_forward.1} parent=51 // pred_check_branch
        %656 = sbr.rel (%p654) target = $region60
      $region59: #{vector_quantizer_forward.1} parent=51 // pred_region
        %s657 = smul.u32 2, %s25
        %p658 = scmp.lt.s32.totalorder %s24, 1
        %s659 = scalar_select %p658, %s24, 1
        %p660 = scmp.lt.s32.totalorder %s657, 1
        %s661 = scalar_select %p660, %s657, 1
        %s662 = smul.addr %s659, 2
        %s663 = sadd.s32 %s661, %s662
        %s664 = scalar_lea.vmem %s5, %s663
      $region60: #{vector_quantizer_forward.1} parent=51 // pred_fallthru
        _
      // Predicated region
      $region61: #{vector_quantizer_forward.1} parent=51 // pred_check
        %p665 = pneg %p203
      $region62: #{vector_quantizer_forward.1} parent=51 // pred_check_branch
        %667 = sbr.rel (%p665) target = $region64
      $region63: #{vector_quantizer_forward.1} parent=51 // pred_region
        %s668 = sadd.s32 %s24, %s25
        %p669 = scmp.lt.s32.totalorder %s668, 1
        %s670 = scalar_select %p669, %s668, 1
        %s671 = scalar_lea.vmem %s6, %s670
      $region64: #{vector_quantizer_forward.1} parent=51 // pred_fallthru
        _
    $region52: #{vector_quantizer_forward.1} parent=5 // pred_fallthru
      _
  $region6: #{vector_quantizer_forward.1} parent=0 // loop_footer
    %s17 = sadd.s32 1, %s13
  $region7: #{vector_quantizer_forward.1} parent=0 // loop_footer_branch
    %12 = sbr.rel target = $region3
  $region8: #{vector_quantizer_forward.1} parent=0 // loop_exit
    _

</llo_original>
